<compile_context>
chip_gen: v6e
topology: v6e:2x2x1
jax: 0.10.0
libtpu: 0.0.40
codegen_flags: <defaults>
</compile_context>

<pallas_src>
import functools

import jax
import jax.numpy as jnp
import numpy as np
from jax.experimental import pallas as pl
from jax.experimental.pallas import tpu as pltpu

GAMMA = 2.0  # module hardcodes self.gamma = 2.0
LANE = 128   # TPU vreg lane width


def _round_up(v, mult):
    return ((v + mult - 1) // mult) * mult


# ---------------------------------------------------------------------------
# Pallas kernel
# ---------------------------------------------------------------------------
def _prox_kernel(npad, x_ref, p_ref, slab_ref, csq_ref, p1_ref, o_ref):
    dot = lambda a, b: jnp.dot(a, b, preferred_element_type=jnp.float32)
    mm_dtype = slab_ref.dtype            # bf16 or f32, decided at init

    # In-kernel cast: inputs arrive f32; the cast is a VPU op hidden under MXU.
    x = x_ref[...].astype(mm_dtype)      # (TB, n)
    p = p_ref[...].astype(mm_dtype)      # (TB, P)

    # One fused MXU pass over the lane-padded x-side constants:
    #   slab = [X1 | 0 ... | C^T | 0 ...]  (n, npad + mpad)
    t = dot(x, slab_ref[...])            # (TB, npad + mpad) f32
    lin = t[:, :npad]                    # lane-aligned tile(s): x @ X1 (zero-padded)
    cx = t[:, npad:]                     # lane-aligned tile(s): C x   (zero-padded)

    # quadratic constraint term: square on the VPU in f32, one cast for the MXU
    sq = (cx * cx).astype(mm_dtype)      # (TB, mpad)

    out = lin + dot(sq, csq_ref[...]) + dot(p, p1_ref[...])   # (TB, npad) f32

    n = o_ref.shape[-1]
    o_ref[...] = out[:, :n].astype(o_ref.dtype)   # single prefix slice at the store


# ---------------------------------------------------------------------------
# Init-time constant folding (plain JAX, mirrors the PyTorch __init__)
# ---------------------------------------------------------------------------
def build_prox_consts(A, C, Bp, Mmat, E, *, gamma=GAMMA):
    m, n = A.shape
    P = Bp.shape[1]
    npad = _round_up(n, LANE)
    mpad = _round_up(m, LANE)

    def F_single(xv, pv):
        return A @ xv + 0.1 * (C @ xv) ** 2 + Bp @ pv

    # JF_fixed=True: Jacobian of F at (0, 0) and its QR factorization
    J0 = jax.jacrev(F_single, argnums=0)(jnp.zeros(n, jnp.float32),
                                         jnp.zeros(P, jnp.float32))     # (m, n)
    Q, R = jnp.linalg.qr(J0.T)                                          # (n,m),(m,m)

    # Conditioning check: a rank-deficient J0 makes the triangular solve
    # silently produce inf/nan constants.
    rdiag = jnp.abs(jnp.diagonal(R))
    if float(jnp.min(rdiag)) <= 1e-6 * max(float(jnp.max(rdiag)), 1e-30):
        raise ValueError("J_F(0,0) is (near) rank-deficient; the folded prox "
                         "constants (R^{-1}) would be invalid.")

    # zeta_row = b_row @ S  with S = R^{-1} Q^T  (triangular solve + Q proj folded)
    S = jax.scipy.linalg.solve_triangular(R, Q.T, lower=False)          # (m, n)
    P_perp = jnp.eye(n, dtype=jnp.float32) - Q @ Q.T                    # (n, n)

    Msym = 0.5 * (Mmat + Mmat.T)                 # grad_x f = Msym x + E p
    D1 = (J0 - A).T                              # (n, m)  (zero here; kept generic)
    G = jnp.eye(n, dtype=jnp.float32) - (gamma / 2.0) * Msym            # (n, n)

    # out_row = x_row @ X1 + (Cx)^2_row @ Csq + p_row @ P1
    X1 = D1 @ S + G @ P_perp                                            # (n, n)
    Csq = -0.1 * S                                                      # (m, n)
    P1 = -(Bp.T @ S) - (gamma / 2.0) * (E.T @ P_perp)                   # (P, n)

    # Lane-padded constants: the lin/cx split sits on a 128-lane boundary and
    # every in-kernel intermediate is a full lane tile.  Zero padding is exact
    # (padded columns/rows contribute 0).
    slab = jnp.zeros((n, npad + mpad), jnp.float32)
    slab = slab.at[:, :n].set(X1)
    slab = slab.at[:, npad:npad + m].set(C.T)                           # (n, npad+mpad)
    csq_pad = jnp.zeros((mpad, npad), jnp.float32).at[:m, :n].set(Csq)  # (mpad, npad)
    p1_pad = jnp.zeros((P, npad), jnp.float32).at[:, :n].set(P1)        # (P, npad)

    consts = {"n": n, "m": m, "P": P, "npad": npad, "mpad": mpad,
              "Q": Q, "R": R, "J0": J0}
    # Store both precisions once at init: no per-call cast kernels.
    for name, arr in (("slab", slab), ("Csq", csq_pad), ("P1", p1_pad)):
        consts[name + "_f32"] = arr
        consts[name + "_bf16"] = arr.astype(jnp.bfloat16)
    return consts


# ---------------------------------------------------------------------------
# Wrapper
# ---------------------------------------------------------------------------
def _default_block_b(B):
    # >=2 grid steps when possible (so ("parallel",) can shard across both v7x
    # TensorCores) but fat tiles (amortize ~0.35us/step + DMA setup).
    if B % 32 == 0 and B > 16:
        block_b = B // 2
        # cap tile rows around 2048 while keeping divisibility & 16-row packing
        while block_b > 2048 and block_b % 32 == 0:
            block_b //= 2
        return block_b
    return B


def prox_pallas(x, parms, consts, *, block_b=None, use_bf16=True):
    """x: (B, n) f32, parms: (B, P) f32 -> (B, n) float32."""
    B, n = x.shape
    P = parms.shape[1]
    assert n == consts["n"] and P == consts["P"]
    npad = consts["npad"]

    if block_b is None:
        block_b = _default_block_b(B)
    row_pack = 16 if use_bf16 else 8     # bf16 packs 16 rows per sublane tile
    assert B % block_b == 0 and block_b % row_pack == 0, (B, block_b)

    key = "bf16" if use_bf16 else "f32"
    slab = consts["slab_" + key]         # (n, npad+mpad)
    csq = consts["Csq_" + key]           # (mpad, npad)
    p1 = consts["P1_" + key]             # (P, npad)

    kernel = functools.partial(_prox_kernel, npad)

    # TODO(synk): optionally fold p@P1 into the x-side slab (stack [[X1,C^T],[P1,0]]
    # and feed concat([x, parms])); only a net win if the wrapper concat fuses.
    return pl.pallas_call(
        kernel,
        out_shape=jax.ShapeDtypeStruct((B, n), jnp.float32),
        grid=(B // block_b,),
        in_specs=[
            pl.BlockSpec((block_b, n), lambda i: (i, 0)),    # x   (f32, cast in-kernel)
            pl.BlockSpec((block_b, P), lambda i: (i, 0)),    # p   (f32, cast in-kernel)
            pl.BlockSpec(slab.shape, lambda i: (0, 0)),      # constants: fetched once
            pl.BlockSpec(csq.shape, lambda i: (0, 0)),
            pl.BlockSpec(p1.shape, lambda i: (0, 0)),
        ],
        out_specs=pl.BlockSpec((block_b, n), lambda i: (i, 0)),
        compiler_params=pltpu.CompilerParams(
            dimension_semantics=("parallel",)),
    )(x, parms, slab, csq, p1)


# ---------------------------------------------------------------------------
# Pure-JAX reference (mirrors the PyTorch forward, JF_fixed=True path)
# ---------------------------------------------------------------------------
def reference_forward(x, parms, A, C, Bp, Mmat, E, Q, R, J0):
    Bsz = x.shape[0]

    def F_single(xv, pv):
        return A @ xv + 0.1 * (C @ xv) ** 2 + Bp @ pv

    def f_single(xv, pv):
        return 0.5 * xv @ (Mmat @ xv) + (E @ pv) @ xv

    Fx = jax.vmap(F_single)(x, parms)                               # (B, m)
    fg = jax.vmap(jax.grad(f_single, argnums=0))(x, parms)          # (B, n)
    JFx = jnp.tile(J0[None], (Bsz, 1, 1))                           # (B, m, n)

    x_mat = x[..., None]
    b = -Fx[..., None] + JFx @ x_mat                                # (B, m, 1)
    solve = lambda bb: jax.scipy.linalg.solve_triangular(R.T, bb, lower=True)
    zeta_r = jax.vmap(solve)(b)                                     # (B, m, 1)
    zeta = Q[None] @ zeta_r                                         # (B, n, 1)
    z = x_mat - zeta - GAMMA / 2 * fg[..., None]
    zq = Q[None] @ (Q.T[None] @ z)
    z = z - zq
    x_new = zeta + z
    return jnp.squeeze(x_new, axis=-1)


# ---------------------------------------------------------------------------
# Main
# ---------------------------------------------------------------------------
if __name__ == "__main__":
    B, n, m, P = 16, 32, 8, 16   # batch, x-dim, constraint-dim, parm-dim

    key = jax.random.PRNGKey(0)
    k_a, k_c, k_b, k_w, k_e, k_x, k_p = jax.random.split(key, 7)

    # deterministic "parameters" of f and F
    A = 0.3 * jax.random.normal(k_a, (m, n), jnp.float32)
    C = 0.3 * jax.random.normal(k_c, (m, n), jnp.float32)
    Bp = 0.3 * jax.random.normal(k_b, (m, P), jnp.float32)
    W = jax.random.normal(k_w, (n, n), jnp.float32)
    Mmat = 0.1 * (W + W.T) + jnp.eye(n, dtype=jnp.float32)
    E = 0.3 * jax.random.normal(k_e, (n, P), jnp.float32)

    consts = build_prox_consts(A, C, Bp, Mmat, E)

    x = jax.random.normal(k_x, (B, n), jnp.float32)
    parms = jax.random.normal(k_p, (B, P), jnp.float32)

    ref = jax.block_until_ready(
        reference_forward(x, parms, A, C, Bp, Mmat, E,
                          consts["Q"], consts["R"], consts["J0"]))

    # optimized path: bf16 MXU operands (cast in-kernel), f32 accumulation
    out = jax.block_until_ready(prox_pallas(x, parms, consts, use_bf16=True))
    assert out.shape == (B, n)
    assert bool(jnp.all(jnp.isfinite(out)))
    np.testing.assert_allclose(np.asarray(out), np.asarray(ref),
                               rtol=5e-2, atol=5e-2)   # bf16 MXU tolerance

    # f32 path: tight check of the folded algebra against the unfused reference
    out_f32 = jax.block_until_ready(prox_pallas(x, parms, consts, use_bf16=False))
    np.testing.assert_allclose(np.asarray(out_f32), np.asarray(ref),
                               rtol=1e-4, atol=1e-4)

    # multi-step grid path (>=2 steps -> both v7x TensorCores engaged)
    B2 = 64
    x2 = jax.random.normal(jax.random.PRNGKey(1), (B2, n), jnp.float32)
    p2 = jax.random.normal(jax.random.PRNGKey(2), (B2, P), jnp.float32)
    ref2 = reference_forward(x2, p2, A, C, Bp, Mmat, E,
                             consts["Q"], consts["R"], consts["J0"])
    out2 = jax.block_until_ready(prox_pallas(x2, p2, consts, use_bf16=False))
    np.testing.assert_allclose(np.asarray(out2), np.asarray(ref2),
                               rtol=1e-4, atol=1e-4)

    print("KERNEL_OK")
</pallas_src>

<mosaic_0001>
module attributes {stable_mosaic.version = 11 : i64} {
  func.func @_prox_kernel(%arg0: i32, %arg1: memref<16x32xf32, #tpu.memory_space<vmem>>, %arg2: memref<16x16xf32, #tpu.memory_space<vmem>>, %arg3: memref<32x256xbf16, #tpu.memory_space<vmem>>, %arg4: memref<128x128xbf16, #tpu.memory_space<vmem>>, %arg5: memref<16x128xbf16, #tpu.memory_space<vmem>>, %arg6: memref<16x32xf32, #tpu.memory_space<vmem>>) attributes {dimension_semantics = [#tpu.dimension_semantics<parallel>], iteration_bounds = array<i64: 1>, scalar_prefetch = 0 : i64, scratch_operands = 0 : i64, tpu.core_type = #tpu.core_type<tc>, window_params = [{transform_indices = @transform_0, window_bounds = array<i64: 16, 32>}, {transform_indices = @transform_1, window_bounds = array<i64: 16, 16>}, {pipeline_mode = #tpu.pipeline_mode<synchronous>, transform_indices = @transform_2, window_bounds = array<i64: 32, 256>}, {pipeline_mode = #tpu.pipeline_mode<synchronous>, transform_indices = @transform_3, window_bounds = array<i64: 128, 128>}, {pipeline_mode = #tpu.pipeline_mode<synchronous>, transform_indices = @transform_4, window_bounds = array<i64: 16, 128>}, {transform_indices = @transform_5, window_bounds = array<i64: 16, 32>}]} {
    %c0 = arith.constant 0 : index
    %c0_0 = arith.constant 0 : index
    %0 = vector.load %arg1[%c0, %c0_0] : memref<16x32xf32, #tpu.memory_space<vmem>>, vector<16x32xf32>
    %1 = arith.truncf %0 : vector<16x32xf32> to vector<16x32xbf16>
    %c0_1 = arith.constant 0 : index
    %c0_2 = arith.constant 0 : index
    %2 = vector.load %arg2[%c0_1, %c0_2] : memref<16x16xf32, #tpu.memory_space<vmem>>, vector<16x16xf32>
    %3 = arith.truncf %2 : vector<16x16xf32> to vector<16x16xbf16>
    %c0_3 = arith.constant 0 : index
    %c0_4 = arith.constant 0 : index
    %4 = vector.load %arg3[%c0_3, %c0_4] : memref<32x256xbf16, #tpu.memory_space<vmem>>, vector<32x256xbf16>
    %cst = arith.constant dense<0.000000e+00> : vector<16x256xf32>
    %5 = tpu.matmul %1, %4, %cst {dimension_numbers = #tpu.dot_dimension_numbers<[1], [0], [0], [1], [0, 0, 1, 1], [], []>} : vector<16x32xbf16>, vector<32x256xbf16>, vector<16x256xf32> -> vector<16x256xf32>
    %6 = vector.extract_strided_slice %5 {offsets = [0, 0], sizes = [16, 128], strides = [1, 1]} : vector<16x256xf32> to vector<16x128xf32>
    %7 = vector.extract_strided_slice %5 {offsets = [0, 128], sizes = [16, 128], strides = [1, 1]} : vector<16x256xf32> to vector<16x128xf32>
    %8 = arith.mulf %7, %7 : vector<16x128xf32>
    %9 = arith.truncf %8 : vector<16x128xf32> to vector<16x128xbf16>
    %c0_5 = arith.constant 0 : index
    %c0_6 = arith.constant 0 : index
    %10 = vector.load %arg4[%c0_5, %c0_6] : memref<128x128xbf16, #tpu.memory_space<vmem>>, vector<128x128xbf16>
    %cst_7 = arith.constant dense<0.000000e+00> : vector<16x128xf32>
    %11 = tpu.matmul %9, %10, %cst_7 {dimension_numbers = #tpu.dot_dimension_numbers<[1], [0], [0], [1], [0, 0, 1, 1], [], []>} : vector<16x128xbf16>, vector<128x128xbf16>, vector<16x128xf32> -> vector<16x128xf32>
    %12 = arith.addf %6, %11 : vector<16x128xf32>
    %c0_8 = arith.constant 0 : index
    %c0_9 = arith.constant 0 : index
    %13 = vector.load %arg5[%c0_8, %c0_9] : memref<16x128xbf16, #tpu.memory_space<vmem>>, vector<16x128xbf16>
    %cst_10 = arith.constant dense<0.000000e+00> : vector<16x128xf32>
    %14 = tpu.matmul %3, %13, %cst_10 {dimension_numbers = #tpu.dot_dimension_numbers<[1], [0], [0], [1], [0, 0, 1, 1], [], []>} : vector<16x16xbf16>, vector<16x128xbf16>, vector<16x128xf32> -> vector<16x128xf32>
    %15 = arith.addf %12, %14 : vector<16x128xf32>
    %16 = vector.extract_strided_slice %15 {offsets = [0, 0], sizes = [16, 32], strides = [1, 1]} : vector<16x128xf32> to vector<16x32xf32>
    %c0_11 = arith.constant 0 : index
    %c0_12 = arith.constant 0 : index
    %17 = vector.load %arg6[%c0_11, %c0_12] : memref<16x32xf32, #tpu.memory_space<vmem>>, vector<16x32xf32>
    tpu.vector_store %arg6[%c0_11, %c0_12], %16 {strides = array<i32>} : memref<16x32xf32, #tpu.memory_space<vmem>>, vector<16x32xf32>,
    return
  }
  func.func @transform_0(%arg0: i32) -> (i32, i32) {
    %c0_i32 = arith.constant 0 : i32
    %c0_i32_0 = arith.constant 0 : i32
    return %arg0, %c0_i32 : i32, i32
  }
  func.func @transform_1(%arg0: i32) -> (i32, i32) {
    %c0_i32 = arith.constant 0 : i32
    %c0_i32_0 = arith.constant 0 : i32
    return %arg0, %c0_i32 : i32, i32
  }
  func.func @transform_2(%arg0: i32) -> (i32, i32) {
    %c0_i32 = arith.constant 0 : i32
    %c0_i32_0 = arith.constant 0 : i32
    %c0_i32_1 = arith.constant 0 : i32
    return %c0_i32, %c0_i32_0 : i32, i32
  }
  func.func @transform_3(%arg0: i32) -> (i32, i32) {
    %c0_i32 = arith.constant 0 : i32
    %c0_i32_0 = arith.constant 0 : i32
    %c0_i32_1 = arith.constant 0 : i32
    return %c0_i32, %c0_i32_0 : i32, i32
  }
  func.func @transform_4(%arg0: i32) -> (i32, i32) {
    %c0_i32 = arith.constant 0 : i32
    %c0_i32_0 = arith.constant 0 : i32
    %c0_i32_1 = arith.constant 0 : i32
    return %c0_i32, %c0_i32_0 : i32, i32
  }
  func.func @transform_5(%arg0: i32) -> (i32, i32) {
    %c0_i32 = arith.constant 0 : i32
    %c0_i32_0 = arith.constant 0 : i32
    return %arg0, %c0_i32 : i32, i32
  }
}

</mosaic_0001>

<llo_original>
// kernel: tpu_custom_call.1
$region0: #{tpu_custom_call.1}
  #allocation0 [shape = 'u32[]', space=smem, size = 0x4, offset = 0x4, fixed_abs, tag = 'smem constant byte address 0x4 - core index']
  #allocation1 [shape = 'u32[144,128]{1,0:T(1,128)}', space=vmem, size = 0x12000, scoped, tag = 'internal scratch']
  %s0 = inlined_call_operand.hbm [shape: f32[16,32], index: 0, kind: input, shape index: {}]
  %s1 = inlined_call_operand.hbm [shape: f32[16,16], index: 1, kind: input, shape index: {}]
  %s2 = inlined_call_operand.hbm [shape: bf16[32,256], index: 2, kind: input, shape index: {}]
  %s3 = inlined_call_operand.hbm [shape: bf16[128,128], index: 3, kind: input, shape index: {}]
  %s4 = inlined_call_operand.hbm [shape: bf16[16,128], index: 4, kind: input, shape index: {}]
  %s5 = inlined_call_operand.hbm [shape: f32[16,32], index: 5, kind: output, shape index: {}]
  %s6 = sld [smem:[#allocation0]]
  $region50: #{tpu_custom_call.1} parent=0
    _
  %s8 = ssub.s32 1, %s6
  %s9 = scalar_select 0, %s8, %s6
  $region1: #{tpu_custom_call.1} parent=0
    #allocation2 [shape = 'u8[8192]{0}', space=vmem, size = 0x2000, scoped, tag = 'input window, operand 0, single buffered']
    #allocation3 [shape = 's32[1]{0}', space=sflag, size = 0x4, scoped, tag = 'scoped memory for tpu_custom_call.1']
    #allocation4 [shape = 's32[1]{0}', space=sflag, size = 0x4, scoped, tag = 'scoped memory for tpu_custom_call.1']
    #allocation5 [shape = 'u8[8192]{0}', space=vmem, size = 0x2000, scoped, tag = 'input window, operand 1, single buffered']
    #allocation6 [shape = 's32[1]{0}', space=sflag, size = 0x4, scoped, tag = 'scoped memory for tpu_custom_call.1']
    #allocation7 [shape = 'u8[16384]{0}', space=vmem, size = 0x4000, scoped, tag = 'input window, operand 2, single buffered']
    #allocation8 [shape = 'u8[32768]{0}', space=vmem, size = 0x8000, scoped, tag = 'input window, operand 3, single buffered']
    #allocation9 [shape = 's32[1]{0}', space=sflag, size = 0x4, scoped, tag = 'scoped memory for tpu_custom_call.1']
    #allocation10 [shape = 'u8[4096]{0}', space=vmem, size = 0x1000, scoped, tag = 'input window, operand 4, single buffered']
    #allocation11 [shape = 'u8[8192]{0}', space=vmem, size = 0x2000, scoped, tag = 'output window, operand 0, single buffered']
    %10 = vsyncpa [#allocation3], 0
    %11 = vsyncpa [#allocation6], 0
    %12 = vsyncpa [#allocation9], 0
    %13 = vsyncpa [#allocation4], 0
    // Predicated region
    $region2: #{tpu_custom_call.1} parent=1 // pred_check
      _
    $region3: #{tpu_custom_call.1} parent=1 // pred_check_branch
      %15 = sbr.rel (0) target = $region5
    $region4: #{tpu_custom_call.1} parent=1 // pred_region
      %s17 = ssub.s32 256, 256
      %18 = vsyncadd [#allocation3], %s17
      %s19 = sshll.u32 [#allocation2], 4
      %s20 = int_to_ptr.vmem [resolvable:$true] %s19
      %25 = dma.hbm_to_vmem [thread:$0]  %s0, 256, %s20, [#allocation3], 128, 128, 8
    $region5: #{tpu_custom_call.1} parent=1 // pred_fallthru
      _
    // Predicated region
    $region6: #{tpu_custom_call.1} parent=1 // pred_check
      _
    $region7: #{tpu_custom_call.1} parent=1 // pred_check_branch
      %27 = sbr.rel (0) target = $region9
    $region8: #{tpu_custom_call.1} parent=1 // pred_region
      %s29 = ssub.s32 256, 256
      %30 = vsyncadd [#allocation6], %s29
      %s31 = sshll.u32 [#allocation5], 4
      %s32 = int_to_ptr.vmem [resolvable:$true] %s31
      %37 = dma.hbm_to_vmem [thread:$0]  %s1, 256, %s32, [#allocation6], 128, 128, 8
    $region9: #{tpu_custom_call.1} parent=1 // pred_fallthru
      _
    // Predicated region
    $region10: #{tpu_custom_call.1} parent=1 // pred_check
      _
    $region11: #{tpu_custom_call.1} parent=1 // pred_check_branch
      %39 = sbr.rel (0) target = $region13
    $region12: #{tpu_custom_call.1} parent=1 // pred_region
      %s41 = ssub.s32 512, 512
      %42 = vsyncadd [#allocation6], %s41
      %s43 = sshll.u32 [#allocation7], 4
      %s44 = int_to_ptr.vmem [resolvable:$true] %s43
      %49 = dma.hbm_to_vmem [thread:$0]  %s2, 512, %s44, [#allocation6], 128, 128, 8
    $region13: #{tpu_custom_call.1} parent=1 // pred_fallthru
      _
    // Predicated region
    $region14: #{tpu_custom_call.1} parent=1 // pred_check
      _
    $region15: #{tpu_custom_call.1} parent=1 // pred_check_branch
      %51 = sbr.rel (0) target = $region17
    $region16: #{tpu_custom_call.1} parent=1 // pred_region
      %s53 = ssub.s32 1024, 1024
      %54 = vsyncadd [#allocation9], %s53
      %s55 = sshll.u32 [#allocation8], 4
      %s56 = int_to_ptr.vmem [resolvable:$true] %s55
      %61 = dma.hbm_to_vmem [thread:$0]  %s3, 1024, %s56, [#allocation9], 64, 64, 4
    $region17: #{tpu_custom_call.1} parent=1 // pred_fallthru
      _
    // Predicated region
    $region18: #{tpu_custom_call.1} parent=1 // pred_check
      _
    $region19: #{tpu_custom_call.1} parent=1 // pred_check_branch
      %63 = sbr.rel (0) target = $region21
    $region20: #{tpu_custom_call.1} parent=1 // pred_region
      %s65 = ssub.s32 128, 128
      %66 = vsyncadd [#allocation9], %s65
      %s67 = sshll.u32 [#allocation10], 4
      %s68 = int_to_ptr.vmem [resolvable:$true] %s67
      %73 = dma.hbm_to_vmem [thread:$0]  %s4, 128, %s68, [#allocation9], 64, 64, 4
    $region21: #{tpu_custom_call.1} parent=1 // pred_fallthru
      _
    // Predicated region
    $region22: #{tpu_custom_call.1} parent=1 // pred_check
      _
    $region23: #{tpu_custom_call.1} parent=1 // pred_check_branch
      %75 = sbr.rel (0) target = $region25
    $region24: #{tpu_custom_call.1} parent=1 // pred_region
      %76 = dma.done [#allocation3], 256
    $region25: #{tpu_custom_call.1} parent=1 // pred_fallthru
      _
    // Predicated region
    $region26: #{tpu_custom_call.1} parent=1 // pred_check
      _
    $region27: #{tpu_custom_call.1} parent=1 // pred_check_branch
      %78 = sbr.rel (0) target = $region29
    $region28: #{tpu_custom_call.1} parent=1 // pred_region
      %79 = dma.done [#allocation6], 256
    $region29: #{tpu_custom_call.1} parent=1 // pred_fallthru
      _
    // Predicated region
    $region30: #{tpu_custom_call.1} parent=1 // pred_check
      _
    $region31: #{tpu_custom_call.1} parent=1 // pred_check_branch
      %81 = sbr.rel (0) target = $region33
    $region32: #{tpu_custom_call.1} parent=1 // pred_region
      %82 = dma.done [#allocation6], 512
    $region33: #{tpu_custom_call.1} parent=1 // pred_fallthru
      _
    // Predicated region
    $region34: #{tpu_custom_call.1} parent=1 // pred_check
      _
    $region35: #{tpu_custom_call.1} parent=1 // pred_check_branch
      %84 = sbr.rel (0) target = $region37
    $region36: #{tpu_custom_call.1} parent=1 // pred_region
      %85 = dma.done [#allocation9], 1024
    $region37: #{tpu_custom_call.1} parent=1 // pred_fallthru
      _
    // Predicated region
    $region38: #{tpu_custom_call.1} parent=1 // pred_check
      _
    $region39: #{tpu_custom_call.1} parent=1 // pred_check_branch
      %87 = sbr.rel (0) target = $region41
    $region40: #{tpu_custom_call.1} parent=1 // pred_region
      %88 = dma.done [#allocation9], 128
    $region41: #{tpu_custom_call.1} parent=1 // pred_fallthru
      _
    %v90 = vld [vmem:[#allocation2] sm:$0xff]
    %v91 = vld [vmem:[#allocation2 + $0x8] sm:$0xff]
    %v92 = vpack.c.bf16 %v91, %v90
    %v93 = vld [vmem:[#allocation5] sm:$0xff]
    %v94 = vld [vmem:[#allocation5 + $0x8] sm:$0xff]
    %v95 = vpack.c.bf16 %v94, %v93
    %v96 = vld [vmem:[#allocation7] sm:$0xff]
    %v97 = vld [vmem:[#allocation7 + $0x8] sm:$0xff]
    %v98 = vld [vmem:[#allocation7 + $0x10] sm:$0xff]
    %v99 = vld [vmem:[#allocation7 + $0x18] sm:$0xff]
    %v104 = vunpack.c.l.b16 %v96
    %v105 = vunpack.c.h.b16 %v96
    %v106 = vunpack.c.l.b16 %v97
    %v107 = vunpack.c.h.b16 %v97
    %v108 = vunpack.c.l.b16 %v98
    %v109 = vunpack.c.h.b16 %v98
    %v110 = vunpack.c.l.b16 %v99
    %v111 = vunpack.c.h.b16 %v99
    %v112 = vpack.c.b16 %v106, %v104
    %v113 = vpack.c.b16 %v107, %v105
    %v114 = vpack.c.b16 %v110, %v108
    %v115 = vpack.c.b16 %v111, %v109
    %vm120 = vcmask 261120
    %v122 = vsel %vm120, %v92, 0
    %124 = vmatprep.subr.bf16.mxu0 0
    %125 = vmatpush1.bf16.msra.mxu0 0
    %126 = vmatprep.subr.bf16.mxu0 0
    %127 = vmatpush1.bf16.msra.mxu0 0
    %128 = vmatprep.subr.bf16.mxu0 0
    %129 = vmatpush1.bf16.msra.mxu0 0
    %130 = vmatprep.subr.bf16.mxu0 0
    %131 = vmatpush1.bf16.msra.mxu0 0
    %132 = vmatprep.subr.bf16.mxu0 0
    %133 = vmatpush1.bf16.msra.mxu0 0
    %134 = vmatprep.subr.bf16.mxu0 0
    %135 = vmatpush1.bf16.msra.mxu0 0
    %136 = vmatprep.subr.bf16.mxu0 %v115
    %137 = vmatpush1.bf16.msra.mxu0 %v114
    %138 = vmatprep.subr.bf16.mxu0 %v113
    %139 = vmatpush1.bf16.msra.mxu0 %v112
    %140 = vmatprep.subr.bf16.mxu0 0
    %141 = vmatpush2.bf16.msra.mxu0 0
    %142 = vmatprep.subr.bf16.mxu0 0
    %143 = vmatpush2.bf16.msra.mxu0 0
    %144 = vmatprep.subr.bf16.mxu0 0
    %145 = vmatpush2.bf16.msra.mxu0 0
    %146 = vmatprep.subr.bf16.mxu0 0
    %147 = vmatpush2.bf16.msra.mxu0 0
    %148 = vmatprep.subr.bf16.mxu0 0
    %149 = vmatpush2.bf16.msra.mxu0 0
    %150 = vmatprep.subr.bf16.mxu0 0
    %151 = vmatpush2.bf16.msra.mxu0 0
    %152 = vmatprep.subr.bf16.mxu0 0
    %153 = vmatpush2.bf16.msra.mxu0 0
    %154 = vmatprep.subr.bf16.mxu0 0
    %155 = vmatpush2.bf16.msra.mxu0 0
    %156 = vmatprep.mubr.bf16.mxu0 0
    %157 = vmatmul.mubr.bf16.gmra.mxu0 %v122
    %v158 = vpop.f32.mrf.mxu0
    %v159 = vadd.f32 0.0, %v158
    %v160 = vpop.f32.mrf.mxu0
    %v161 = vadd.f32 0.0, %v160
    %v162 = vpop.f32.mrf.mxu0
    %v163 = vadd.f32 0.0, %v162
    %v164 = vpop.f32.mrf.mxu0
    %v165 = vadd.f32 0.0, %v164
    %166 = vdwg.mxu0
    %v167 = vmul.f32 %v161, %v161
    %v168 = vmul.f32 %v165, %v165
    %v169 = vpack.c.bf16 %v168, %v167
    %v170 = vld [vmem:[#allocation8] sm:$0xf]
    %v171 = vld [vmem:[#allocation8 + $0x4] sm:$0xf]
    %v172 = vld [vmem:[#allocation8 + $0x8] sm:$0xf]
    %v173 = vld [vmem:[#allocation8 + $0xc] sm:$0xf]
    %v174 = vld [vmem:[#allocation8 + $0x10] sm:$0xf]
    %v175 = vld [vmem:[#allocation8 + $0x14] sm:$0xf]
    %v176 = vld [vmem:[#allocation8 + $0x18] sm:$0xf]
    %v177 = vld [vmem:[#allocation8 + $0x1c] sm:$0xf]
    %v178 = vld [vmem:[#allocation8 + $0x20] sm:$0xf]
    %v179 = vld [vmem:[#allocation8 + $0x24] sm:$0xf]
    %v180 = vld [vmem:[#allocation8 + $0x28] sm:$0xf]
    %v181 = vld [vmem:[#allocation8 + $0x2c] sm:$0xf]
    %v182 = vld [vmem:[#allocation8 + $0x30] sm:$0xf]
    %v183 = vld [vmem:[#allocation8 + $0x34] sm:$0xf]
    %v184 = vld [vmem:[#allocation8 + $0x38] sm:$0xf]
    %v185 = vld [vmem:[#allocation8 + $0x3c] sm:$0xf]
    %v202 = vunpack.c.l.b16 %v170
    %v203 = vunpack.c.l.b16 %v171
    %v204 = vunpack.c.l.b16 %v172
    %v205 = vunpack.c.l.b16 %v173
    %v206 = vunpack.c.l.b16 %v174
    %v207 = vunpack.c.l.b16 %v175
    %v208 = vunpack.c.l.b16 %v176
    %v209 = vunpack.c.l.b16 %v177
    %v210 = vunpack.c.l.b16 %v178
    %v211 = vunpack.c.l.b16 %v179
    %v212 = vunpack.c.l.b16 %v180
    %v213 = vunpack.c.l.b16 %v181
    %v214 = vunpack.c.l.b16 %v182
    %v215 = vunpack.c.l.b16 %v183
    %v216 = vunpack.c.l.b16 %v184
    %v217 = vunpack.c.l.b16 %v185
    %v218 = vpack.c.b16 %v203, %v202
    %v219 = vpack.c.b16 %v205, %v204
    %v220 = vpack.c.b16 %v207, %v206
    %v221 = vpack.c.b16 %v209, %v208
    %v222 = vpack.c.b16 %v211, %v210
    %v223 = vpack.c.b16 %v213, %v212
    %v224 = vpack.c.b16 %v215, %v214
    %v225 = vpack.c.b16 %v217, %v216
    %234 = vmatprep.subr.bf16.mxu0 0
    %235 = vmatpush1.bf16.msra.mxu0 %v225
    %236 = vmatprep.subr.bf16.mxu0 0
    %237 = vmatpush1.bf16.msra.mxu0 %v224
    %238 = vmatprep.subr.bf16.mxu0 0
    %239 = vmatpush1.bf16.msra.mxu0 %v223
    %240 = vmatprep.subr.bf16.mxu0 0
    %241 = vmatpush1.bf16.msra.mxu0 %v222
    %242 = vmatprep.subr.bf16.mxu0 0
    %243 = vmatpush1.bf16.msra.mxu0 %v221
    %244 = vmatprep.subr.bf16.mxu0 0
    %245 = vmatpush1.bf16.msra.mxu0 %v220
    %246 = vmatprep.subr.bf16.mxu0 0
    %247 = vmatpush1.bf16.msra.mxu0 %v219
    %248 = vmatprep.subr.bf16.mxu0 0
    %249 = vmatpush1.bf16.msra.mxu0 %v218
    %250 = vmatprep.subr.bf16.mxu0 0
    %251 = vmatpush2.bf16.msra.mxu0 0
    %252 = vmatprep.subr.bf16.mxu0 0
    %253 = vmatpush2.bf16.msra.mxu0 0
    %254 = vmatprep.subr.bf16.mxu0 0
    %255 = vmatpush2.bf16.msra.mxu0 0
    %256 = vmatprep.subr.bf16.mxu0 0
    %257 = vmatpush2.bf16.msra.mxu0 0
    %258 = vmatprep.subr.bf16.mxu0 0
    %259 = vmatpush2.bf16.msra.mxu0 0
    %260 = vmatprep.subr.bf16.mxu0 0
    %261 = vmatpush2.bf16.msra.mxu0 0
    %262 = vmatprep.subr.bf16.mxu0 0
    %263 = vmatpush2.bf16.msra.mxu0 0
    %264 = vmatprep.subr.bf16.mxu0 0
    %265 = vmatpush2.bf16.msra.mxu0 0
    %266 = vmatprep.mubr.bf16.mxu0 0
    %267 = vmatmul.mubr.bf16.gmra.mxu0 %v169
    %v268 = vpop.f32.mrf.mxu0
    %v269 = vadd.f32 0.0, %v268
    %v270 = vpop.f32.mrf.mxu0
    %v271 = vpop.f32.mrf.mxu0
    %v272 = vadd.f32 0.0, %v271
    %v273 = vpop.f32.mrf.mxu0
    %274 = vdwg.mxu0
    %v275 = vadd.f32 %v159, %v269
    %v276 = vadd.f32 %v163, %v272
    %v277 = vld [vmem:[#allocation10] sm:$0xf]
    %v278 = vld [vmem:[#allocation10 + $0x4] sm:$0xf]
    %v281 = vunpack.c.l.b16 %v277
    %v282 = vunpack.c.l.b16 %v278
    %v283 = vpack.c.b16 %v282, %v281
    %vm285 = vcmask 130048
    %v287 = vsel %vm285, %v95, 0
    %289 = vmatprep.subr.bf16.mxu0 0
    %290 = vmatpush1.bf16.msra.mxu0 0
    %291 = vmatprep.subr.bf16.mxu0 0
    %292 = vmatpush1.bf16.msra.mxu0 0
    %293 = vmatprep.subr.bf16.mxu0 0
    %294 = vmatpush1.bf16.msra.mxu0 0
    %295 = vmatprep.subr.bf16.mxu0 0
    %296 = vmatpush1.bf16.msra.mxu0 0
    %297 = vmatprep.subr.bf16.mxu0 0
    %298 = vmatpush1.bf16.msra.mxu0 0
    %299 = vmatprep.subr.bf16.mxu0 0
    %300 = vmatpush1.bf16.msra.mxu0 0
    %301 = vmatprep.subr.bf16.mxu0 0
    %302 = vmatpush1.bf16.msra.mxu0 0
    %303 = vmatprep.subr.bf16.mxu0 0
    %304 = vmatpush1.bf16.msra.mxu0 %v283
    %305 = vmatprep.subr.bf16.mxu0 0
    %306 = vmatpush2.bf16.msra.mxu0 0
    %307 = vmatprep.subr.bf16.mxu0 0
    %308 = vmatpush2.bf16.msra.mxu0 0
    %309 = vmatprep.subr.bf16.mxu0 0
    %310 = vmatpush2.bf16.msra.mxu0 0
    %311 = vmatprep.subr.bf16.mxu0 0
    %312 = vmatpush2.bf16.msra.mxu0 0
    %313 = vmatprep.subr.bf16.mxu0 0
    %314 = vmatpush2.bf16.msra.mxu0 0
    %315 = vmatprep.subr.bf16.mxu0 0
    %316 = vmatpush2.bf16.msra.mxu0 0
    %317 = vmatprep.subr.bf16.mxu0 0
    %318 = vmatpush2.bf16.msra.mxu0 0
    %319 = vmatprep.subr.bf16.mxu0 0
    %320 = vmatpush2.bf16.msra.mxu0 0
    %321 = vmatprep.mubr.bf16.mxu0 0
    %322 = vmatmul.mubr.bf16.gmra.mxu0 %v287
    %v323 = vpop.f32.mrf.mxu0
    %v324 = vadd.f32 0.0, %v323
    %v325 = vpop.f32.mrf.mxu0
    %v326 = vpop.f32.mrf.mxu0
    %v327 = vadd.f32 0.0, %v326
    %v328 = vpop.f32.mrf.mxu0
    %329 = vdwg.mxu0
    %v330 = vadd.f32 %v275, %v324
    %v331 = vadd.f32 %v276, %v327
    %332 = vst.msk [vmem:[#allocation11] sm:$0xff] %vm120, %v330
    %333 = vst.msk [vmem:[#allocation11 + $0x8] sm:$0xff] %vm120, %v331
    // Predicated region
    $region42: #{tpu_custom_call.1} parent=1 // pred_check
      _
    $region43: #{tpu_custom_call.1} parent=1 // pred_check_branch
      %335 = sbr.rel (0) target = $region45
    $region44: #{tpu_custom_call.1} parent=1 // pred_region
      %s337 = ssub.s32 256, 256
      %338 = vsyncadd [#allocation4], %s337
      %s339 = sshll.u32 [#allocation11], 4
      %s340 = int_to_ptr.vmem [resolvable:$true] %s339
      %345 = dma.vmem_to_hbm [thread:$0]  %s340, 256, %s5, [#allocation4], 128, 128, 8
    $region45: #{tpu_custom_call.1} parent=1 // pred_fallthru
      _
    // Predicated region
    $region46: #{tpu_custom_call.1} parent=1 // pred_check
      _
    $region47: #{tpu_custom_call.1} parent=1 // pred_check_branch
      %347 = sbr.rel (0) target = $region49
    $region48: #{tpu_custom_call.1} parent=1 // pred_region
      %348 = dma.done [#allocation4], 256
    $region49: #{tpu_custom_call.1} parent=1 // pred_fallthru
      _
    %349 = vsyncpa [#allocation3], 1
    %350 = vsyncpa [#allocation6], 1
    %351 = vsyncpa [#allocation9], 1
    %352 = vsyncpa [#allocation4], 1

</llo_original>
